<compile_context>
chip_gen: v5e
topology: v5e:2x2
jax: 0.10.0
libtpu: 0.0.40
codegen_flags: <defaults>
</compile_context>

<pallas_src>
import functools

import jax
import jax.numpy as jnp
from jax import lax
from jax.experimental import pallas as pl
from jax.experimental.pallas import tpu as pltpu


def _diff_loss_kernel(x1_ref, x2_ref, out_ref,
                      g1_acc, g2_acc, sq1_acc, sq2_acc, *, inv_scale):
    """Grid axis 0 streams feature tiles; accumulators persist across steps."""
    d = pl.program_id(0)
    nd = pl.num_programs(0)
    b = x1_ref.shape[0]

    @pl.when(d == 0)
    def _init():
        g1_acc[...] = jnp.zeros_like(g1_acc)
        g2_acc[...] = jnp.zeros_like(g2_acc)
        sq1_acc[...] = jnp.zeros_like(sq1_acc)
        sq2_acc[...] = jnp.zeros_like(sq2_acc)

    # Upcast on load; center across the batch (sublane) axis — per-column, so
    # each feature tile is independent.
    x1 = x1_ref[...].astype(jnp.float32)          # (B, T)
    x2 = x2_ref[...].astype(jnp.float32)
    x1c = x1 - jnp.mean(x1, axis=0, keepdims=True)
    x2c = x2 - jnp.mean(x2, axis=0, keepdims=True)

    # Per-row sum of squares (-> L2 norms at finalize).  Direct VPU square +
    # lane reduce; no diagonal extraction needed later.
    sq1_acc[...] += jnp.sum(x1c * x1c, axis=1, keepdims=True)   # (B, 1)
    sq2_acc[...] += jnp.sum(x2c * x2c, axis=1, keepdims=True)

    if b >= 128:
        # Large batch: real MXU work (contraction over the feature/lane axis).
        dims = (((1,), (1,)), ((), ()))
        g1_acc[...] += lax.dot_general(x1c, x1c, dims,
                                       preferred_element_type=jnp.float32)
        g2_acc[...] += lax.dot_general(x2c, x2c, dims,
                                       preferred_element_type=jnp.float32)
    else:
        # Small batch: building the B x B Gram on the VPU avoids the
        # transpose + MXU round trip (MXU would be <0.1% utilized at B=2).
        # Column i of G is sum_t(x * x[i]) — a broadcast multiply + lane
        # reduce; the (B,1) result is placed into lane i with a cheap
        # single-vreg mask (runs on a (B,B) tile, negligible vs (B,T) work).
        jj = lax.broadcasted_iota(jnp.int32, (b, b), 1)
        g1_t = jnp.zeros((b, b), jnp.float32)
        g2_t = jnp.zeros((b, b), jnp.float32)
        for i in range(b):  # static unroll; b is small here
            c1 = jnp.sum(x1c * x1c[i:i + 1, :], axis=1, keepdims=True)  # G1[:, i]
            c2 = jnp.sum(x2c * x2c[i:i + 1, :], axis=1, keepdims=True)  # G2[:, i]
            g1_t = g1_t + jnp.where(jj == i, c1, 0.0)
            g2_t = g2_t + jnp.where(jj == i, c2, 0.0)
        g1_acc[...] += g1_t
        g2_acc[...] += g2_t

    @pl.when(d == nd - 1)
    def _finalize():
        # n_i = sqrt(sum_t x_c[i,t]^2);  w[i] = 1/((n1_i+eps)(n2_i+eps)).
        inv1 = 1.0 / (jnp.sqrt(sq1_acc[...]) + 1e-6)        # (B, 1)
        inv2 = 1.0 / (jnp.sqrt(sq2_acc[...]) + 1e-6)        # (B, 1)
        w_col = inv1 * inv2                                   # (B, 1)
        # Row-oriented copy of w (runs once per kernel, single-vreg work).
        ii = lax.broadcasted_iota(jnp.int32, (b, b), 0)
        jj = lax.broadcasted_iota(jnp.int32, (b, b), 1)
        w_row = jnp.sum(jnp.where(ii == jj, w_col, 0.0),
                        axis=0, keepdims=True)                # (1, B)
        loss_sum = jnp.sum(g1_acc[...] * g2_acc[...] * w_col * w_row)
        out_ref[0, 0] = loss_sum * inv_scale                  # mean over D1*D2


def diff_loss(input1, input2, *, tile_d=8192):
    """Pallas TPU implementation of DiffLoss.forward (returns scalar loss)."""
    b = input1.shape[0]
    assert input2.shape[0] == b, "batch sizes must match"
    x1 = input1.reshape(b, -1)
    x2 = input2.reshape(b, -1)
    d1 = x1.shape[1]
    d2 = x2.shape[1]

    # Feature tiling: single full-width tile when it fits comfortably,
    # otherwise lane-aligned tiles with zero padding (exact: padded columns
    # have zero batch-mean and contribute nothing to Grams or norms).
    tile_d = max(128, (int(tile_d) // 128) * 128)
    d_max = max(d1, d2)
    if d_max <= tile_d:
        t = d_max
        n_tiles = 1
    else:
        t = tile_d
        n_tiles = pl.cdiv(d_max, t)
    dp = n_tiles * t

    def _pad(x, d):
        return x if d == dp else jnp.pad(x, ((0, 0), (0, dp - d)))

    x1p = _pad(x1, d1)
    x2p = _pad(x2, d2)

    kernel = functools.partial(
        _diff_loss_kernel, inv_scale=1.0 / (float(d1) * float(d2)))

    # Deeper prefetch only when streaming many tiles (per-tile compute is
    # tiny, so DMA issue latency can be the exposed cost at large D).
    spec_kwargs = dict(pipeline_mode=pl.Buffered(3)) if n_tiles >= 8 else {}
    in_specs = [
        pl.BlockSpec((b, t), lambda d: (0, d), **spec_kwargs),
        pl.BlockSpec((b, t), lambda d: (0, d), **spec_kwargs),
    ]
    out_spec = pl.BlockSpec((1, 1), lambda d: (0, 0),
                            memory_space=pltpu.MemorySpace.SMEM)

    itemsize1 = jnp.dtype(x1.dtype).itemsize
    itemsize2 = jnp.dtype(x2.dtype).itemsize
    cost = pl.CostEstimate(
        flops=int(2 * b * b * (d1 + d2) + 6 * b * (d1 + d2)),
        transcendentals=int(2 * b),
        bytes_accessed=int(b * (d1 * itemsize1 + d2 * itemsize2) + 4),
    )

    out = pl.pallas_call(
        kernel,
        out_shape=jax.ShapeDtypeStruct((1, 1), jnp.float32),
        grid_spec=pltpu.PrefetchScalarGridSpec(
            num_scalar_prefetch=0,
            grid=(n_tiles,),
            in_specs=in_specs,
            out_specs=out_spec,
            scratch_shapes=[
                pltpu.VMEM((b, b), jnp.float32),   # G1 accumulator
                pltpu.VMEM((b, b), jnp.float32),   # G2 accumulator
                pltpu.VMEM((b, 1), jnp.float32),   # row sum-of-squares x1
                pltpu.VMEM((b, 1), jnp.float32),   # row sum-of-squares x2
            ],
        ),
        compiler_params=pltpu.CompilerParams(
            dimension_semantics=("arbitrary",),
        ),
        cost_estimate=cost,
    )(x1p, x2p)
    return out[0, 0]


def _diff_loss_ref(input1, input2):
    """Pure-JAX reference mirroring the PyTorch forward (for validation)."""
    b = input1.shape[0]
    x1 = input1.reshape(b, -1).astype(jnp.float32)
    x2 = input2.reshape(b, -1).astype(jnp.float32)
    x1 = x1 - jnp.mean(x1, axis=0, keepdims=True)
    x2 = x2 - jnp.mean(x2, axis=0, keepdims=True)
    n1 = jnp.linalg.norm(x1, axis=1, keepdims=True)
    n2 = jnp.linalg.norm(x2, axis=1, keepdims=True)
    x1 = x1 / (n1 + 1e-6)
    x2 = x2 / (n2 + 1e-6)
    m = x1.T @ x2
    return jnp.mean(m ** 2)


if __name__ == "__main__":
    key = jax.random.PRNGKey(0)
    k1, k2, k3, k4 = jax.random.split(key, 4)

    # Primary shape from the module spec: batch=2, channels=4, spatial=16x16.
    a1 = jax.random.normal(k1, (2, 4, 16, 16), dtype=jnp.float32)
    a2 = jax.random.normal(k2, (2, 4, 16, 16), dtype=jnp.float32)
    loss1 = jax.block_until_ready(diff_loss(a1, a2))
    ref1 = jax.block_until_ready(_diff_loss_ref(a1, a2))
    assert jnp.allclose(loss1, ref1, rtol=1e-4, atol=1e-9), (loss1, ref1)

    # Multi-tile + padding path: D = 4096, tile 1536 -> 3 tiles (padded).
    b1 = jax.random.normal(k3, (2, 4, 32, 32), dtype=jnp.float32)
    b2 = jax.random.normal(k4, (2, 4, 32, 32), dtype=jnp.float32)
    loss2 = jax.block_until_ready(diff_loss(b1, b2, tile_d=1536))
    ref2 = jax.block_until_ready(_diff_loss_ref(b1, b2))
    assert jnp.allclose(loss2, ref2, rtol=1e-4, atol=1e-9), (loss2, ref2)

    print("KERNEL_OK")
</pallas_src>

<mosaic_0001>
module attributes {stable_mosaic.version = 11 : i64} {
  func.func @_diff_loss_kernel(%arg0: i32, %arg1: memref<2x1024xf32, #tpu.memory_space<vmem>>, %arg2: memref<2x1024xf32, #tpu.memory_space<vmem>>, %arg3: memref<1x1xf32, #tpu.memory_space<smem>>, %arg4: memref<2x2xf32, #tpu.memory_space<vmem>>, %arg5: memref<2x2xf32, #tpu.memory_space<vmem>>, %arg6: memref<2x1xf32, #tpu.memory_space<vmem>>, %arg7: memref<2x1xf32, #tpu.memory_space<vmem>>) attributes {dimension_semantics = [#tpu.dimension_semantics<arbitrary>], iteration_bounds = array<i64: 1>, scalar_prefetch = 0 : i64, scratch_operands = 4 : i64, tpu.core_type = #tpu.core_type<tc>, window_params = [{transform_indices = @transform_0, window_bounds = array<i64: 2, 1024>}, {transform_indices = @transform_1, window_bounds = array<i64: 2, 1024>}, {transform_indices = @transform_2, window_bounds = array<i64: 1, 1>}]} {
    %c0_i32 = arith.constant 0 : i32
    %0 = arith.cmpi eq, %arg0, %c0_i32 : i32
    %1 = arith.extui %0 : i1 to i32
    %c0_i32_0 = arith.constant 0 : i32
    %2 = arith.cmpi ne, %1, %c0_i32_0 : i32
    scf.if %2 {
      %cst_40 = arith.constant 0.000000e+00 : f32
      %89 = vector.broadcast %cst_40 : f32 to vector<2x2xf32>
      %c0_41 = arith.constant 0 : index
      %c0_42 = arith.constant 0 : index
      %90 = vector.load %arg4[%c0_41, %c0_42] : memref<2x2xf32, #tpu.memory_space<vmem>>, vector<2x2xf32>
      tpu.vector_store %arg4[%c0_41, %c0_42], %89 {strides = array<i32>} : memref<2x2xf32, #tpu.memory_space<vmem>>, vector<2x2xf32>,
      %cst_43 = arith.constant 0.000000e+00 : f32
      %91 = vector.broadcast %cst_43 : f32 to vector<2x2xf32>
      %c0_44 = arith.constant 0 : index
      %c0_45 = arith.constant 0 : index
      %92 = vector.load %arg5[%c0_44, %c0_45] : memref<2x2xf32, #tpu.memory_space<vmem>>, vector<2x2xf32>
      tpu.vector_store %arg5[%c0_44, %c0_45], %91 {strides = array<i32>} : memref<2x2xf32, #tpu.memory_space<vmem>>, vector<2x2xf32>,
      %cst_46 = arith.constant 0.000000e+00 : f32
      %93 = vector.broadcast %cst_46 : f32 to vector<2x1xf32>
      %c0_47 = arith.constant 0 : index
      %c0_48 = arith.constant 0 : index
      %94 = vector.load %arg6[%c0_47, %c0_48] : memref<2x1xf32, #tpu.memory_space<vmem>>, vector<2x1xf32>
      tpu.vector_store %arg6[%c0_47, %c0_48], %93 {strides = array<i32>} : memref<2x1xf32, #tpu.memory_space<vmem>>, vector<2x1xf32>,
      %cst_49 = arith.constant 0.000000e+00 : f32
      %95 = vector.broadcast %cst_49 : f32 to vector<2x1xf32>
      %c0_50 = arith.constant 0 : index
      %c0_51 = arith.constant 0 : index
      %96 = vector.load %arg7[%c0_50, %c0_51] : memref<2x1xf32, #tpu.memory_space<vmem>>, vector<2x1xf32>
      tpu.vector_store %arg7[%c0_50, %c0_51], %95 {strides = array<i32>} : memref<2x1xf32, #tpu.memory_space<vmem>>, vector<2x1xf32>,
    } else {
    }
    %c0 = arith.constant 0 : index
    %c0_1 = arith.constant 0 : index
    %3 = vector.load %arg1[%c0, %c0_1] : memref<2x1024xf32, #tpu.memory_space<vmem>>, vector<2x1024xf32>
    %c0_2 = arith.constant 0 : index
    %c0_3 = arith.constant 0 : index
    %4 = vector.load %arg2[%c0_2, %c0_3] : memref<2x1024xf32, #tpu.memory_space<vmem>>, vector<2x1024xf32>
    %cst = arith.constant dense<0.000000e+00> : vector<1024xf32>
    %5 = vector.multi_reduction <add>, %3, %cst [0] : vector<2x1024xf32> to vector<1024xf32>
    %6 = vector.shape_cast %5 : vector<1024xf32> to vector<1x1024xf32>
    %cst_4 = arith.constant 2.000000e+00 : f32
    %7 = vector.broadcast %cst_4 : f32 to vector<1x1024xf32>
    %8 = arith.divf %6, %7 : vector<1x1024xf32>
    %9 = vector.broadcast %8 : vector<1x1024xf32> to vector<2x1024xf32>
    %10 = arith.subf %3, %9 : vector<2x1024xf32>
    %cst_5 = arith.constant dense<0.000000e+00> : vector<1024xf32>
    %11 = vector.multi_reduction <add>, %4, %cst_5 [0] : vector<2x1024xf32> to vector<1024xf32>
    %12 = vector.shape_cast %11 : vector<1024xf32> to vector<1x1024xf32>
    %cst_6 = arith.constant 2.000000e+00 : f32
    %13 = vector.broadcast %cst_6 : f32 to vector<1x1024xf32>
    %14 = arith.divf %12, %13 : vector<1x1024xf32>
    %15 = vector.broadcast %14 : vector<1x1024xf32> to vector<2x1024xf32>
    %16 = arith.subf %4, %15 : vector<2x1024xf32>
    %c0_7 = arith.constant 0 : index
    %c0_8 = arith.constant 0 : index
    %17 = vector.load %arg6[%c0_7, %c0_8] : memref<2x1xf32, #tpu.memory_space<vmem>>, vector<2x1xf32>
    %18 = arith.mulf %10, %10 : vector<2x1024xf32>
    %cst_9 = arith.constant dense<0.000000e+00> : vector<2xf32>
    %19 = vector.multi_reduction <add>, %18, %cst_9 [1] : vector<2x1024xf32> to vector<2xf32>
    %20 = vector.shape_cast %19 : vector<2xf32> to vector<2x1xf32>
    %21 = arith.addf %17, %20 : vector<2x1xf32>
    %c0_10 = arith.constant 0 : index
    %c0_11 = arith.constant 0 : index
    %22 = vector.load %arg6[%c0_10, %c0_11] : memref<2x1xf32, #tpu.memory_space<vmem>>, vector<2x1xf32>
    tpu.vector_store %arg6[%c0_10, %c0_11], %21 {strides = array<i32>} : memref<2x1xf32, #tpu.memory_space<vmem>>, vector<2x1xf32>,
    %c0_12 = arith.constant 0 : index
    %c0_13 = arith.constant 0 : index
    %23 = vector.load %arg7[%c0_12, %c0_13] : memref<2x1xf32, #tpu.memory_space<vmem>>, vector<2x1xf32>
    %24 = arith.mulf %16, %16 : vector<2x1024xf32>
    %cst_14 = arith.constant dense<0.000000e+00> : vector<2xf32>
    %25 = vector.multi_reduction <add>, %24, %cst_14 [1] : vector<2x1024xf32> to vector<2xf32>
    %26 = vector.shape_cast %25 : vector<2xf32> to vector<2x1xf32>
    %27 = arith.addf %23, %26 : vector<2x1xf32>
    %c0_15 = arith.constant 0 : index
    %c0_16 = arith.constant 0 : index
    %28 = vector.load %arg7[%c0_15, %c0_16] : memref<2x1xf32, #tpu.memory_space<vmem>>, vector<2x1xf32>
    tpu.vector_store %arg7[%c0_15, %c0_16], %27 {strides = array<i32>} : memref<2x1xf32, #tpu.memory_space<vmem>>, vector<2x1xf32>,
    %29 = tpu.iota {dimensions = array<i32: 1>} : vector<2x2xi32>
    %cst_17 = arith.constant 0.000000e+00 : f32
    %30 = vector.broadcast %cst_17 : f32 to vector<2x2xf32>
    %cst_18 = arith.constant 0.000000e+00 : f32
    %31 = vector.broadcast %cst_18 : f32 to vector<2x2xf32>
    %32 = vector.extract_strided_slice %10 {offsets = [0, 0], sizes = [1, 1024], strides = [1, 1]} : vector<2x1024xf32> to vector<1x1024xf32>
    %33 = vector.broadcast %32 : vector<1x1024xf32> to vector<2x1024xf32>
    %34 = arith.mulf %10, %33 : vector<2x1024xf32>
    %cst_19 = arith.constant dense<0.000000e+00> : vector<2xf32>
    %35 = vector.multi_reduction <add>, %34, %cst_19 [1] : vector<2x1024xf32> to vector<2xf32>
    %36 = vector.shape_cast %35 : vector<2xf32> to vector<2x1xf32>
    %37 = vector.extract_strided_slice %16 {offsets = [0, 0], sizes = [1, 1024], strides = [1, 1]} : vector<2x1024xf32> to vector<1x1024xf32>
    %38 = vector.broadcast %37 : vector<1x1024xf32> to vector<2x1024xf32>
    %39 = arith.mulf %16, %38 : vector<2x1024xf32>
    %cst_20 = arith.constant dense<0.000000e+00> : vector<2xf32>
    %40 = vector.multi_reduction <add>, %39, %cst_20 [1] : vector<2x1024xf32> to vector<2xf32>
    %41 = vector.shape_cast %40 : vector<2xf32> to vector<2x1xf32>
    %c0_i32_21 = arith.constant 0 : i32
    %42 = vector.broadcast %c0_i32_21 : i32 to vector<2x2xi32>
    %43 = arith.cmpi eq, %29, %42 : vector<2x2xi32>
    %cst_22 = arith.constant 0.000000e+00 : f32
    %44 = vector.shape_cast %36 : vector<2x1xf32> to vector<2x1xf32>
    %45 = vector.broadcast %44 : vector<2x1xf32> to vector<2x2xf32>
    %46 = vector.broadcast %cst_22 : f32 to vector<2x2xf32>
    %47 = arith.select %43, %45, %46 : vector<2x2xi1>, vector<2x2xf32>
    %48 = arith.addf %30, %47 : vector<2x2xf32>
    %c0_i32_23 = arith.constant 0 : i32
    %49 = vector.broadcast %c0_i32_23 : i32 to vector<2x2xi32>
    %50 = arith.cmpi eq, %29, %49 : vector<2x2xi32>
    %cst_24 = arith.constant 0.000000e+00 : f32
    %51 = vector.shape_cast %41 : vector<2x1xf32> to vector<2x1xf32>
    %52 = vector.broadcast %51 : vector<2x1xf32> to vector<2x2xf32>
    %53 = vector.broadcast %cst_24 : f32 to vector<2x2xf32>
    %54 = arith.select %50, %52, %53 : vector<2x2xi1>, vector<2x2xf32>
    %55 = arith.addf %31, %54 : vector<2x2xf32>
    %56 = vector.extract_strided_slice %10 {offsets = [1, 0], sizes = [1, 1024], strides = [1, 1]} : vector<2x1024xf32> to vector<1x1024xf32>
    %57 = vector.broadcast %56 : vector<1x1024xf32> to vector<2x1024xf32>
    %58 = arith.mulf %10, %57 : vector<2x1024xf32>
    %cst_25 = arith.constant dense<0.000000e+00> : vector<2xf32>
    %59 = vector.multi_reduction <add>, %58, %cst_25 [1] : vector<2x1024xf32> to vector<2xf32>
    %60 = vector.shape_cast %59 : vector<2xf32> to vector<2x1xf32>
    %61 = vector.extract_strided_slice %16 {offsets = [1, 0], sizes = [1, 1024], strides = [1, 1]} : vector<2x1024xf32> to vector<1x1024xf32>
    %62 = vector.broadcast %61 : vector<1x1024xf32> to vector<2x1024xf32>
    %63 = arith.mulf %16, %62 : vector<2x1024xf32>
    %cst_26 = arith.constant dense<0.000000e+00> : vector<2xf32>
    %64 = vector.multi_reduction <add>, %63, %cst_26 [1] : vector<2x1024xf32> to vector<2xf32>
    %65 = vector.shape_cast %64 : vector<2xf32> to vector<2x1xf32>
    %c1_i32 = arith.constant 1 : i32
    %66 = vector.broadcast %c1_i32 : i32 to vector<2x2xi32>
    %67 = arith.cmpi eq, %29, %66 : vector<2x2xi32>
    %cst_27 = arith.constant 0.000000e+00 : f32
    %68 = vector.shape_cast %60 : vector<2x1xf32> to vector<2x1xf32>
    %69 = vector.broadcast %68 : vector<2x1xf32> to vector<2x2xf32>
    %70 = vector.broadcast %cst_27 : f32 to vector<2x2xf32>
    %71 = arith.select %67, %69, %70 : vector<2x2xi1>, vector<2x2xf32>
    %72 = arith.addf %48, %71 : vector<2x2xf32>
    %c1_i32_28 = arith.constant 1 : i32
    %73 = vector.broadcast %c1_i32_28 : i32 to vector<2x2xi32>
    %74 = arith.cmpi eq, %29, %73 : vector<2x2xi32>
    %cst_29 = arith.constant 0.000000e+00 : f32
    %75 = vector.shape_cast %65 : vector<2x1xf32> to vector<2x1xf32>
    %76 = vector.broadcast %75 : vector<2x1xf32> to vector<2x2xf32>
    %77 = vector.broadcast %cst_29 : f32 to vector<2x2xf32>
    %78 = arith.select %74, %76, %77 : vector<2x2xi1>, vector<2x2xf32>
    %79 = arith.addf %55, %78 : vector<2x2xf32>
    %c0_30 = arith.constant 0 : index
    %c0_31 = arith.constant 0 : index
    %80 = vector.load %arg4[%c0_30, %c0_31] : memref<2x2xf32, #tpu.memory_space<vmem>>, vector<2x2xf32>
    %81 = arith.addf %80, %72 : vector<2x2xf32>
    %c0_32 = arith.constant 0 : index
    %c0_33 = arith.constant 0 : index
    %82 = vector.load %arg4[%c0_32, %c0_33] : memref<2x2xf32, #tpu.memory_space<vmem>>, vector<2x2xf32>
    tpu.vector_store %arg4[%c0_32, %c0_33], %81 {strides = array<i32>} : memref<2x2xf32, #tpu.memory_space<vmem>>, vector<2x2xf32>,
    %c0_34 = arith.constant 0 : index
    %c0_35 = arith.constant 0 : index
    %83 = vector.load %arg5[%c0_34, %c0_35] : memref<2x2xf32, #tpu.memory_space<vmem>>, vector<2x2xf32>
    %84 = arith.addf %83, %79 : vector<2x2xf32>
    %c0_36 = arith.constant 0 : index
    %c0_37 = arith.constant 0 : index
    %85 = vector.load %arg5[%c0_36, %c0_37] : memref<2x2xf32, #tpu.memory_space<vmem>>, vector<2x2xf32>
    tpu.vector_store %arg5[%c0_36, %c0_37], %84 {strides = array<i32>} : memref<2x2xf32, #tpu.memory_space<vmem>>, vector<2x2xf32>,
    %c0_i32_38 = arith.constant 0 : i32
    %86 = arith.cmpi eq, %arg0, %c0_i32_38 : i32
    %87 = arith.extui %86 : i1 to i32
    %c0_i32_39 = arith.constant 0 : i32
    %88 = arith.cmpi ne, %87, %c0_i32_39 : i32
    scf.if %88 {
      %c0_40 = arith.constant 0 : index
      %c0_41 = arith.constant 0 : index
      %89 = vector.load %arg6[%c0_40, %c0_41] : memref<2x1xf32, #tpu.memory_space<vmem>>, vector<2x1xf32>
      %90 = math.sqrt %89 : vector<2x1xf32>
      %cst_42 = arith.constant 9.99999997E-7 : f32
      %91 = vector.broadcast %cst_42 : f32 to vector<2x1xf32>
      %92 = arith.addf %90, %91 : vector<2x1xf32>
      %cst_43 = arith.constant 1.000000e+00 : f32
      %93 = vector.broadcast %cst_43 : f32 to vector<2x1xf32>
      %94 = arith.divf %93, %92 : vector<2x1xf32>
      %c0_44 = arith.constant 0 : index
      %c0_45 = arith.constant 0 : index
      %95 = vector.load %arg7[%c0_44, %c0_45] : memref<2x1xf32, #tpu.memory_space<vmem>>, vector<2x1xf32>
      %96 = math.sqrt %95 : vector<2x1xf32>
      %cst_46 = arith.constant 9.99999997E-7 : f32
      %97 = vector.broadcast %cst_46 : f32 to vector<2x1xf32>
      %98 = arith.addf %96, %97 : vector<2x1xf32>
      %cst_47 = arith.constant 1.000000e+00 : f32
      %99 = vector.broadcast %cst_47 : f32 to vector<2x1xf32>
      %100 = arith.divf %99, %98 : vector<2x1xf32>
      %101 = arith.mulf %94, %100 : vector<2x1xf32>
      %102 = tpu.iota {dimensions = array<i32: 0>} : vector<2x2xi32>
      %103 = tpu.iota {dimensions = array<i32: 1>} : vector<2x2xi32>
      %104 = arith.cmpi eq, %102, %103 : vector<2x2xi32>
      %cst_48 = arith.constant 0.000000e+00 : f32
      %105 = vector.shape_cast %101 : vector<2x1xf32> to vector<2x1xf32>
      %106 = vector.broadcast %105 : vector<2x1xf32> to vector<2x2xf32>
      %107 = vector.broadcast %cst_48 : f32 to vector<2x2xf32>
      %108 = arith.select %104, %106, %107 : vector<2x2xi1>, vector<2x2xf32>
      %cst_49 = arith.constant dense<0.000000e+00> : vector<2xf32>
      %109 = vector.multi_reduction <add>, %108, %cst_49 [0] : vector<2x2xf32> to vector<2xf32>
      %110 = vector.shape_cast %109 : vector<2xf32> to vector<1x2xf32>
      %c0_50 = arith.constant 0 : index
      %c0_51 = arith.constant 0 : index
      %111 = vector.load %arg4[%c0_50, %c0_51] : memref<2x2xf32, #tpu.memory_space<vmem>>, vector<2x2xf32>
      %c0_52 = arith.constant 0 : index
      %c0_53 = arith.constant 0 : index
      %112 = vector.load %arg5[%c0_52, %c0_53] : memref<2x2xf32, #tpu.memory_space<vmem>>, vector<2x2xf32>
      %113 = arith.mulf %111, %112 : vector<2x2xf32>
      %114 = vector.broadcast %101 : vector<2x1xf32> to vector<2x2xf32>
      %115 = arith.mulf %113, %114 : vector<2x2xf32>
      %116 = vector.broadcast %110 : vector<1x2xf32> to vector<2x2xf32>
      %117 = arith.mulf %115, %116 : vector<2x2xf32>
      %118 = vector.shape_cast %117 : vector<2x2xf32> to vector<1x2x2xf32>
      %cst_54 = arith.constant dense<0.000000e+00> : vector<1xf32>
      %119 = vector.multi_reduction <add>, %118, %cst_54 [1, 2] : vector<1x2x2xf32> to vector<1xf32>
      %120 = vector.shape_cast %119 : vector<1xf32> to vector<1x1x1xf32>
      %121 = vector.extract %120[0, 0, 0] : f32 from vector<1x1x1xf32>
      %cst_55 = arith.constant 9.53674316E-7 : f32
      %122 = arith.mulf %121, %cst_55 : f32
      %c0_56 = arith.constant 0 : index
      %c0_57 = arith.constant 0 : index
      %123 = memref.load %arg3[%c0_56, %c0_57] : memref<1x1xf32, #tpu.memory_space<smem>>
      memref.store %122, %arg3[%c0_56, %c0_57] : memref<1x1xf32, #tpu.memory_space<smem>>
    } else {
    }
    return
  }
  func.func @transform_0(%arg0: i32) -> (i32, i32) {
    %c0_i32 = arith.constant 0 : i32
    %c0_i32_0 = arith.constant 0 : i32
    return %c0_i32, %arg0 : i32, i32
  }
  func.func @transform_1(%arg0: i32) -> (i32, i32) {
    %c0_i32 = arith.constant 0 : i32
    %c0_i32_0 = arith.constant 0 : i32
    return %c0_i32, %arg0 : i32, i32
  }
  func.func @transform_2(%arg0: i32) -> (i32, i32) {
    %c0_i32 = arith.constant 0 : i32
    %c0_i32_0 = arith.constant 0 : i32
    %c0_i32_1 = arith.constant 0 : i32
    return %c0_i32, %c0_i32_0 : i32, i32
  }
}

</mosaic_0001>

<llo_original>
// kernel: tpu_custom_call.1
$region0: #{tpu_custom_call.1}
  #allocation0 [shape = 'u32[]', space=smem, size = 0x4, offset = 0x4, fixed_abs, tag = 'smem constant byte address 0x4 - core index']
  #allocation1 [shape = 'u32[72,128]{1,0:T(1,128)}', space=vmem, size = 0x9000, scoped, tag = 'internal scratch']
  #allocation2 [shape = 'f32[2,2]{1,0:T(2,128)}', space=vmem, size = 0x400, scoped, tag = 'scratch operand']
  #allocation3 [shape = 'f32[2,2]{1,0:T(2,128)}', space=vmem, size = 0x400, scoped, tag = 'scratch operand']
  #allocation4 [shape = 'f32[2,1]{1,0:T(2,128)}', space=vmem, size = 0x400, scoped, tag = 'scratch operand']
  #allocation5 [shape = 'f32[2,1]{1,0:T(2,128)}', space=vmem, size = 0x400, scoped, tag = 'scratch operand']
  %s0 = inlined_call_operand.hbm [shape: f32[2,1024], index: 0, kind: input, shape index: {}]
  %s1 = inlined_call_operand.hbm [shape: f32[2,1024], index: 1, kind: input, shape index: {}]
  %s2 = inlined_call_operand.hbm [shape: f32[1,1], index: 2, kind: output, shape index: {}]
  %s3 = sld [smem:[#allocation0]]
  $region34: #{tpu_custom_call.1} parent=0
    _
  %s5 = ssub.s32 1, %s3
  %s6 = scalar_select 0, %s5, %s3
  $region1: #{tpu_custom_call.1} parent=0
    #allocation6 [shape = 'u8[8192]{0}', space=vmem, size = 0x2000, scoped, tag = 'input window, operand 0, single buffered']
    #allocation7 [shape = 's32[1]{0}', space=sflag, size = 0x4, scoped, tag = 'scoped memory for tpu_custom_call.1']
    #allocation8 [shape = 's32[1]{0}', space=sflag, size = 0x4, scoped, tag = 'scoped memory for tpu_custom_call.1']
    #allocation9 [shape = 'u8[8192]{0}', space=vmem, size = 0x2000, scoped, tag = 'input window, operand 1, single buffered']
    #allocation10 [shape = 's32[1]{0}', space=sflag, size = 0x4, scoped, tag = 'scoped memory for tpu_custom_call.1']
    #allocation11 [shape = 'u8[512]{0}', space=smem, size = 0x200, scoped, tag = 'output window, operand 0, single buffered']
    %7 = vsyncpa [#allocation7], 0
    %8 = vsyncpa [#allocation10], 0
    %9 = vsyncpa [#allocation8], 0
    // Predicated region
    $region2: #{tpu_custom_call.1} parent=1 // pred_check
      _
    $region3: #{tpu_custom_call.1} parent=1 // pred_check_branch
      %11 = sbr.rel (0) target = $region5
    $region4: #{tpu_custom_call.1} parent=1 // pred_region
      %13 = vsyncadd [#allocation7], 0
      %s15 = sshll.u32 %s0, 4
      %s16 = int_to_ptr.hbm [resolvable:$true] %s15
      %s17 = sshll.u32 [#allocation6], 4
      %s18 = int_to_ptr.vmem [resolvable:$true] %s17
      %20 = dma.hbm_to_vmem [thread:$0]  %s16, 256, %s18, [#allocation7]
    $region5: #{tpu_custom_call.1} parent=1 // pred_fallthru
      _
    // Predicated region
    $region6: #{tpu_custom_call.1} parent=1 // pred_check
      _
    $region7: #{tpu_custom_call.1} parent=1 // pred_check_branch
      %22 = sbr.rel (0) target = $region9
    $region8: #{tpu_custom_call.1} parent=1 // pred_region
      %24 = vsyncadd [#allocation10], 0
      %s26 = sshll.u32 %s1, 4
      %s27 = int_to_ptr.hbm [resolvable:$true] %s26
      %s28 = sshll.u32 [#allocation9], 4
      %s29 = int_to_ptr.vmem [resolvable:$true] %s28
      %31 = dma.hbm_to_vmem [thread:$0]  %s27, 256, %s29, [#allocation10]
    $region9: #{tpu_custom_call.1} parent=1 // pred_fallthru
      _
    // Predicated region
    $region10: #{tpu_custom_call.1} parent=1 // pred_check
      _
    $region11: #{tpu_custom_call.1} parent=1 // pred_check_branch
      %33 = sbr.rel (0) target = $region13
    $region12: #{tpu_custom_call.1} parent=1 // pred_region
      %35 = dma.done [#allocation7], 256
    $region13: #{tpu_custom_call.1} parent=1 // pred_fallthru
      _
    // Predicated region
    $region14: #{tpu_custom_call.1} parent=1 // pred_check
      _
    $region15: #{tpu_custom_call.1} parent=1 // pred_check_branch
      %37 = sbr.rel (0) target = $region17
    $region16: #{tpu_custom_call.1} parent=1 // pred_region
      %39 = dma.done [#allocation10], 256
    $region17: #{tpu_custom_call.1} parent=1 // pred_fallthru
      _
    %p40 = scmp.eq.s32.totalorder 0, 0
    // Predicated region
    $region18: #{tpu_custom_call.1} parent=1 // pred_check
      %p41 = pneg %p40
    $region19: #{tpu_custom_call.1} parent=1 // pred_check_branch
      %43 = sbr.rel (%p41) target = $region21
    $region20: #{tpu_custom_call.1} parent=1 // pred_region
      %vm44 = vcmask 9216
      %45 = vst.msk [vmem:[#allocation2] sm:$0x3] %vm44, 0.0
      %46 = vst.msk [vmem:[#allocation3] sm:$0x3] %vm44, 0.0
      %vm47 = vcmask 1024
      %48 = vst.msk [vmem:[#allocation4] sm:$0x3] %vm47, 0.0
      %49 = vst.msk [vmem:[#allocation5] sm:$0x3] %vm47, 0.0
    $region21: #{tpu_custom_call.1} parent=1 // pred_fallthru
      _
    %v50 = vld [vmem:[#allocation6] sm:$0xff]
    %v51 = vld [vmem:[#allocation6 + $0x8] sm:$0xff]
    %v52 = vld [vmem:[#allocation9] sm:$0xff]
    %v53 = vld [vmem:[#allocation9 + $0x8] sm:$0xff]
    %56 = vst [vmem:[#allocation1] ss:$4 sm:$0xff] %v50
    %s57 = scalar_lea.vmem [#allocation1], 32
    %58 = vst [vmem:[%s57] ss:$4 sm:$0xff] %v51
    %v59 = vld.sshfl [vmem:[#allocation1] sm:$0xff pattern:$0x73625140]
    %v60 = vld.sshfl [vmem:[#allocation1 + $0x8] sm:$0xff pattern:$0x73625140]
    %v61 = vld.sshfl [vmem:[#allocation1 + $0x10] sm:$0xff pattern:$0x73625140]
    %v62 = vld.sshfl [vmem:[#allocation1 + $0x18] sm:$0xff pattern:$0x73625140]
    %v63 = vld.sshfl [vmem:[#allocation1 + $0x20] sm:$0xff pattern:$0x73625140]
    %v64 = vld.sshfl [vmem:[#allocation1 + $0x28] sm:$0xff pattern:$0x73625140]
    %v65 = vld.sshfl [vmem:[#allocation1 + $0x30] sm:$0xff pattern:$0x73625140]
    %v66 = vld.sshfl [vmem:[#allocation1 + $0x38] sm:$0xff pattern:$0x73625140]
    %vm75 = vcmask 1041408
    %v76 = vsel %vm75, %v59, 0.0
    %v77 = vrot.slane %v76, 4
    %v78 = vadd.f32 %v76, %v77
    %v79 = vrot.slane %v78, 2
    %v80 = vadd.f32 %v78, %v79
    %v81 = vrot.slane %v80, 1
    %v82 = vadd.f32 %v80, %v81
    %v83 = vsel %vm75, %v60, 0.0
    %v84 = vrot.slane %v83, 4
    %v85 = vadd.f32 %v83, %v84
    %v86 = vrot.slane %v85, 2
    %v87 = vadd.f32 %v85, %v86
    %v88 = vrot.slane %v87, 1
    %v89 = vadd.f32 %v87, %v88
    %v90 = vsel %vm75, %v61, 0.0
    %v91 = vrot.slane %v90, 4
    %v92 = vadd.f32 %v90, %v91
    %v93 = vrot.slane %v92, 2
    %v94 = vadd.f32 %v92, %v93
    %v95 = vrot.slane %v94, 1
    %v96 = vadd.f32 %v94, %v95
    %v97 = vsel %vm75, %v62, 0.0
    %v98 = vrot.slane %v97, 4
    %v99 = vadd.f32 %v97, %v98
    %v100 = vrot.slane %v99, 2
    %v101 = vadd.f32 %v99, %v100
    %v102 = vrot.slane %v101, 1
    %v103 = vadd.f32 %v101, %v102
    %v104 = vsel %vm75, %v63, 0.0
    %v105 = vrot.slane %v104, 4
    %v106 = vadd.f32 %v104, %v105
    %v107 = vrot.slane %v106, 2
    %v108 = vadd.f32 %v106, %v107
    %v109 = vrot.slane %v108, 1
    %v110 = vadd.f32 %v108, %v109
    %v111 = vsel %vm75, %v64, 0.0
    %v112 = vrot.slane %v111, 4
    %v113 = vadd.f32 %v111, %v112
    %v114 = vrot.slane %v113, 2
    %v115 = vadd.f32 %v113, %v114
    %v116 = vrot.slane %v115, 1
    %v117 = vadd.f32 %v115, %v116
    %v118 = vsel %vm75, %v65, 0.0
    %v119 = vrot.slane %v118, 4
    %v120 = vadd.f32 %v118, %v119
    %v121 = vrot.slane %v120, 2
    %v122 = vadd.f32 %v120, %v121
    %v123 = vrot.slane %v122, 1
    %v124 = vadd.f32 %v122, %v123
    %v125 = vsel %vm75, %v66, 0.0
    %v126 = vrot.slane %v125, 4
    %v127 = vadd.f32 %v125, %v126
    %v128 = vrot.slane %v127, 2
    %v129 = vadd.f32 %v127, %v128
    %v130 = vrot.slane %v129, 1
    %v131 = vadd.f32 %v129, %v130
    %v132 = vrcp.pop 2.0
    %v133 = vmul.f32 2.0, %v132
    %v134 = vsub.f32 1.0, %v133
    %v135 = vmul.f32 %v132, %v134
    %v136 = vadd.f32 %v132, %v135
    %vm137 = vweird.f32 %v132
    %v138 = vsel %vm137, %v132, %v136
    %v139 = vmul.f32 %v82, %v138
    %v140 = vmul.f32 %v89, %v138
    %v141 = vmul.f32 %v96, %v138
    %v142 = vmul.f32 %v103, %v138
    %v143 = vmul.f32 %v110, %v138
    %v144 = vmul.f32 %v117, %v138
    %v145 = vmul.f32 %v124, %v138
    %v146 = vmul.f32 %v131, %v138
    %v155 = vrot.slane %v140, 6
    %v156 = vrot.slane %v141, 4
    %v157 = vrot.slane %v142, 2
    %v158 = vrot.slane %v144, 6
    %v159 = vrot.slane %v145, 4
    %v160 = vrot.slane %v146, 2
    %v161 = vsel %vm75, %v139, %v155
    %vm162 = vcmask 1045508
    %v163 = vsel %vm162, %v156, %v157
    %vm164 = vcmask 1043456
    %v165 = vsel %vm164, %v161, %v163
    %v166 = vsel %vm75, %v143, %v158
    %v167 = vsel %vm162, %v159, %v160
    %v168 = vsel %vm164, %v166, %v167
    %v171 = vsub.f32 %v50, %v165
    %v172 = vsub.f32 %v51, %v168
    %175 = vst [vmem:[#allocation1] ss:$4 sm:$0xff] %v52
    %s176 = scalar_lea.vmem [#allocation1], 32
    %177 = vst [vmem:[%s176] ss:$4 sm:$0xff] %v53
    %v178 = vld.sshfl [vmem:[#allocation1] sm:$0xff pattern:$0x73625140]
    %v179 = vld.sshfl [vmem:[#allocation1 + $0x8] sm:$0xff pattern:$0x73625140]
    %v180 = vld.sshfl [vmem:[#allocation1 + $0x10] sm:$0xff pattern:$0x73625140]
    %v181 = vld.sshfl [vmem:[#allocation1 + $0x18] sm:$0xff pattern:$0x73625140]
    %v182 = vld.sshfl [vmem:[#allocation1 + $0x20] sm:$0xff pattern:$0x73625140]
    %v183 = vld.sshfl [vmem:[#allocation1 + $0x28] sm:$0xff pattern:$0x73625140]
    %v184 = vld.sshfl [vmem:[#allocation1 + $0x30] sm:$0xff pattern:$0x73625140]
    %v185 = vld.sshfl [vmem:[#allocation1 + $0x38] sm:$0xff pattern:$0x73625140]
    %v194 = vsel %vm75, %v178, 0.0
    %v195 = vrot.slane %v194, 4
    %v196 = vadd.f32 %v194, %v195
    %v197 = vrot.slane %v196, 2
    %v198 = vadd.f32 %v196, %v197
    %v199 = vrot.slane %v198, 1
    %v200 = vadd.f32 %v198, %v199
    %v201 = vsel %vm75, %v179, 0.0
    %v202 = vrot.slane %v201, 4
    %v203 = vadd.f32 %v201, %v202
    %v204 = vrot.slane %v203, 2
    %v205 = vadd.f32 %v203, %v204
    %v206 = vrot.slane %v205, 1
    %v207 = vadd.f32 %v205, %v206
    %v208 = vsel %vm75, %v180, 0.0
    %v209 = vrot.slane %v208, 4
    %v210 = vadd.f32 %v208, %v209
    %v211 = vrot.slane %v210, 2
    %v212 = vadd.f32 %v210, %v211
    %v213 = vrot.slane %v212, 1
    %v214 = vadd.f32 %v212, %v213
    %v215 = vsel %vm75, %v181, 0.0
    %v216 = vrot.slane %v215, 4
    %v217 = vadd.f32 %v215, %v216
    %v218 = vrot.slane %v217, 2
    %v219 = vadd.f32 %v217, %v218
    %v220 = vrot.slane %v219, 1
    %v221 = vadd.f32 %v219, %v220
    %v222 = vsel %vm75, %v182, 0.0
    %v223 = vrot.slane %v222, 4
    %v224 = vadd.f32 %v222, %v223
    %v225 = vrot.slane %v224, 2
    %v226 = vadd.f32 %v224, %v225
    %v227 = vrot.slane %v226, 1
    %v228 = vadd.f32 %v226, %v227
    %v229 = vsel %vm75, %v183, 0.0
    %v230 = vrot.slane %v229, 4
    %v231 = vadd.f32 %v229, %v230
    %v232 = vrot.slane %v231, 2
    %v233 = vadd.f32 %v231, %v232
    %v234 = vrot.slane %v233, 1
    %v235 = vadd.f32 %v233, %v234
    %v236 = vsel %vm75, %v184, 0.0
    %v237 = vrot.slane %v236, 4
    %v238 = vadd.f32 %v236, %v237
    %v239 = vrot.slane %v238, 2
    %v240 = vadd.f32 %v238, %v239
    %v241 = vrot.slane %v240, 1
    %v242 = vadd.f32 %v240, %v241
    %v243 = vsel %vm75, %v185, 0.0
    %v244 = vrot.slane %v243, 4
    %v245 = vadd.f32 %v243, %v244
    %v246 = vrot.slane %v245, 2
    %v247 = vadd.f32 %v245, %v246
    %v248 = vrot.slane %v247, 1
    %v249 = vadd.f32 %v247, %v248
    %v250 = vmul.f32 %v200, %v138
    %v251 = vmul.f32 %v207, %v138
    %v252 = vmul.f32 %v214, %v138
    %v253 = vmul.f32 %v221, %v138
    %v254 = vmul.f32 %v228, %v138
    %v255 = vmul.f32 %v235, %v138
    %v256 = vmul.f32 %v242, %v138
    %v257 = vmul.f32 %v249, %v138
    %v266 = vrot.slane %v251, 6
    %v267 = vrot.slane %v252, 4
    %v268 = vrot.slane %v253, 2
    %v269 = vrot.slane %v255, 6
    %v270 = vrot.slane %v256, 4
    %v271 = vrot.slane %v257, 2
    %v272 = vsel %vm75, %v250, %v266
    %v273 = vsel %vm162, %v267, %v268
    %v274 = vsel %vm164, %v272, %v273
    %v275 = vsel %vm75, %v254, %v269
    %v276 = vsel %vm162, %v270, %v271
    %v277 = vsel %vm164, %v275, %v276
    %v280 = vsub.f32 %v52, %v274
    %v281 = vsub.f32 %v53, %v277
    %v282 = vld [vmem:[#allocation4] sm:$0x3]
    %v283 = vmul.f32 %v171, %v171
    %v284 = vmul.f32 %v172, %v172
    %287 = vst [vmem:[#allocation1] ss:$4 sm:$0xff] %v283
    %s288 = scalar_lea.vmem [#allocation1], 32
    %289 = vst [vmem:[%s288] ss:$4 sm:$0xff] %v284
    %v290 = vld.sshfl [vmem:[#allocation1] sm:$0xff pattern:$0x73625140]
    %v291 = vld.sshfl [vmem:[#allocation1 + $0x8] sm:$0xff pattern:$0x73625140]
    %v292 = vld.sshfl [vmem:[#allocation1 + $0x10] sm:$0xff pattern:$0x73625140]
    %v293 = vld.sshfl [vmem:[#allocation1 + $0x18] sm:$0xff pattern:$0x73625140]
    %v294 = vld.sshfl [vmem:[#allocation1 + $0x20] sm:$0xff pattern:$0x73625140]
    %v295 = vld.sshfl [vmem:[#allocation1 + $0x28] sm:$0xff pattern:$0x73625140]
    %v296 = vld.sshfl [vmem:[#allocation1 + $0x30] sm:$0xff pattern:$0x73625140]
    %v297 = vld.sshfl [vmem:[#allocation1 + $0x38] sm:$0xff pattern:$0x73625140]
    %v306 = vsel %vm75, %v290, 0.0
    %v307 = vsel %vm75, %v291, 0.0
    %v308 = vadd.f32 %v306, %v307
    %v309 = vsel %vm75, %v292, 0.0
    %v310 = vadd.f32 %v308, %v309
    %v311 = vsel %vm75, %v293, 0.0
    %v312 = vadd.f32 %v310, %v311
    %v313 = vsel %vm75, %v294, 0.0
    %v314 = vadd.f32 %v312, %v313
    %v315 = vsel %vm75, %v295, 0.0
    %v316 = vadd.f32 %v314, %v315
    %v317 = vsel %vm75, %v296, 0.0
    %v318 = vadd.f32 %v316, %v317
    %v319 = vsel %vm75, %v297, 0.0
    %v320 = vadd.f32 %v318, %v319
    %321 = vadd.xlane.f32.xlu0 %v320
    %v322 = vpop.xlane.xlu0 %321
    %v323 = vadd.f32 %v282, %v322
    %vm324 = vcmask 1024
    %325 = vst.msk [vmem:[#allocation4] sm:$0x3] %vm324, %v323
    %v326 = vld [vmem:[#allocation5] sm:$0x3]
    %v327 = vmul.f32 %v280, %v280
    %v328 = vmul.f32 %v281, %v281
    %331 = vst [vmem:[#allocation1] ss:$4 sm:$0xff] %v327
    %s332 = scalar_lea.vmem [#allocation1], 32
    %333 = vst [vmem:[%s332] ss:$4 sm:$0xff] %v328
    %v334 = vld.sshfl [vmem:[#allocation1] sm:$0xff pattern:$0x73625140]
    %v335 = vld.sshfl [vmem:[#allocation1 + $0x8] sm:$0xff pattern:$0x73625140]
    %v336 = vld.sshfl [vmem:[#allocation1 + $0x10] sm:$0xff pattern:$0x73625140]
    %v337 = vld.sshfl [vmem:[#allocation1 + $0x18] sm:$0xff pattern:$0x73625140]
    %v338 = vld.sshfl [vmem:[#allocation1 + $0x20] sm:$0xff pattern:$0x73625140]
    %v339 = vld.sshfl [vmem:[#allocation1 + $0x28] sm:$0xff pattern:$0x73625140]
    %v340 = vld.sshfl [vmem:[#allocation1 + $0x30] sm:$0xff pattern:$0x73625140]
    %v341 = vld.sshfl [vmem:[#allocation1 + $0x38] sm:$0xff pattern:$0x73625140]
    %v350 = vsel %vm75, %v334, 0.0
    %v351 = vsel %vm75, %v335, 0.0
    %v352 = vadd.f32 %v350, %v351
    %v353 = vsel %vm75, %v336, 0.0
    %v354 = vadd.f32 %v352, %v353
    %v355 = vsel %vm75, %v337, 0.0
    %v356 = vadd.f32 %v354, %v355
    %v357 = vsel %vm75, %v338, 0.0
    %v358 = vadd.f32 %v356, %v357
    %v359 = vsel %vm75, %v339, 0.0
    %v360 = vadd.f32 %v358, %v359
    %v361 = vsel %vm75, %v340, 0.0
    %v362 = vadd.f32 %v360, %v361
    %v363 = vsel %vm75, %v341, 0.0
    %v364 = vadd.f32 %v362, %v363
    %365 = vadd.xlane.f32.xlu0 %v364
    %v366 = vpop.xlane.xlu0 %365
    %v367 = vadd.f32 %v326, %v366
    %368 = vst.msk [vmem:[#allocation5] sm:$0x3] %vm324, %v367
    %v369 = vlaneseq
    %v370 = vand.u32 %v369, 127
    %v373 = vperm.slane %v171, 0
    %v374 = vperm.slane %v171, 2
    %v375 = vperm.slane %v171, 4
    %v376 = vperm.slane %v171, 6
    %v377 = vperm.slane %v172, 0
    %v378 = vperm.slane %v172, 2
    %v379 = vperm.slane %v172, 4
    %v380 = vperm.slane %v172, 6
    %v389 = vperm.slane %v373, 0
    %v390 = vperm.slane %v374, 0
    %v391 = vperm.slane %v375, 0
    %v392 = vperm.slane %v376, 0
    %v393 = vperm.slane %v377, 0
    %v394 = vperm.slane %v378, 0
    %v395 = vperm.slane %v379, 0
    %v396 = vperm.slane %v380, 0
    %v405 = vrot.slane %v390, 6
    %v406 = vrot.slane %v391, 4
    %v407 = vrot.slane %v392, 2
    %v408 = vrot.slane %v394, 6
    %v409 = vrot.slane %v395, 4
    %v410 = vrot.slane %v396, 2
    %v411 = vsel %vm75, %v389, %v405
    %v412 = vsel %vm162, %v406, %v407
    %v413 = vsel %vm164, %v411, %v412
    %v414 = vsel %vm75, %v393, %v408
    %v415 = vsel %vm162, %v409, %v410
    %v416 = vsel %vm164, %v414, %v415
    %v419 = vmul.f32 %v171, %v413
    %v420 = vmul.f32 %v172, %v416
    %423 = vst [vmem:[#allocation1] ss:$4 sm:$0xff] %v419
    %s424 = scalar_lea.vmem [#allocation1], 32
    %425 = vst [vmem:[%s424] ss:$4 sm:$0xff] %v420
    %v426 = vld.sshfl [vmem:[#allocation1] sm:$0xff pattern:$0x73625140]
    %v427 = vld.sshfl [vmem:[#allocation1 + $0x8] sm:$0xff pattern:$0x73625140]
    %v428 = vld.sshfl [vmem:[#allocation1 + $0x10] sm:$0xff pattern:$0x73625140]
    %v429 = vld.sshfl [vmem:[#allocation1 + $0x18] sm:$0xff pattern:$0x73625140]
    %v430 = vld.sshfl [vmem:[#allocation1 + $0x20] sm:$0xff pattern:$0x73625140]
    %v431 = vld.sshfl [vmem:[#allocation1 + $0x28] sm:$0xff pattern:$0x73625140]
    %v432 = vld.sshfl [vmem:[#allocation1 + $0x30] sm:$0xff pattern:$0x73625140]
    %v433 = vld.sshfl [vmem:[#allocation1 + $0x38] sm:$0xff pattern:$0x73625140]
    %v442 = vsel %vm75, %v426, 0.0
    %v443 = vsel %vm75, %v427, 0.0
    %v444 = vadd.f32 %v442, %v443
    %v445 = vsel %vm75, %v428, 0.0
    %v446 = vadd.f32 %v444, %v445
    %v447 = vsel %vm75, %v429, 0.0
    %v448 = vadd.f32 %v446, %v447
    %v449 = vsel %vm75, %v430, 0.0
    %v450 = vadd.f32 %v448, %v449
    %v451 = vsel %vm75, %v431, 0.0
    %v452 = vadd.f32 %v450, %v451
    %v453 = vsel %vm75, %v432, 0.0
    %v454 = vadd.f32 %v452, %v453
    %v455 = vsel %vm75, %v433, 0.0
    %v456 = vadd.f32 %v454, %v455
    %457 = vadd.xlane.f32.xlu0 %v456
    %v458 = vpop.xlane.xlu0 %457
    %v461 = vperm.slane %v280, 0
    %v462 = vperm.slane %v280, 2
    %v463 = vperm.slane %v280, 4
    %v464 = vperm.slane %v280, 6
    %v465 = vperm.slane %v281, 0
    %v466 = vperm.slane %v281, 2
    %v467 = vperm.slane %v281, 4
    %v468 = vperm.slane %v281, 6
    %v477 = vperm.slane %v461, 0
    %v478 = vperm.slane %v462, 0
    %v479 = vperm.slane %v463, 0
    %v480 = vperm.slane %v464, 0
    %v481 = vperm.slane %v465, 0
    %v482 = vperm.slane %v466, 0
    %v483 = vperm.slane %v467, 0
    %v484 = vperm.slane %v468, 0
    %v493 = vrot.slane %v478, 6
    %v494 = vrot.slane %v479, 4
    %v495 = vrot.slane %v480, 2
    %v496 = vrot.slane %v482, 6
    %v497 = vrot.slane %v483, 4
    %v498 = vrot.slane %v484, 2
    %v499 = vsel %vm75, %v477, %v493
    %v500 = vsel %vm162, %v494, %v495
    %v501 = vsel %vm164, %v499, %v500
    %v502 = vsel %vm75, %v481, %v496
    %v503 = vsel %vm162, %v497, %v498
    %v504 = vsel %vm164, %v502, %v503
    %v507 = vmul.f32 %v280, %v501
    %v508 = vmul.f32 %v281, %v504
    %511 = vst [vmem:[#allocation1] ss:$4 sm:$0xff] %v507
    %s512 = scalar_lea.vmem [#allocation1], 32
    %513 = vst [vmem:[%s512] ss:$4 sm:$0xff] %v508
    %v514 = vld.sshfl [vmem:[#allocation1] sm:$0xff pattern:$0x73625140]
    %v515 = vld.sshfl [vmem:[#allocation1 + $0x8] sm:$0xff pattern:$0x73625140]
    %v516 = vld.sshfl [vmem:[#allocation1 + $0x10] sm:$0xff pattern:$0x73625140]
    %v517 = vld.sshfl [vmem:[#allocation1 + $0x18] sm:$0xff pattern:$0x73625140]
    %v518 = vld.sshfl [vmem:[#allocation1 + $0x20] sm:$0xff pattern:$0x73625140]
    %v519 = vld.sshfl [vmem:[#allocation1 + $0x28] sm:$0xff pattern:$0x73625140]
    %v520 = vld.sshfl [vmem:[#allocation1 + $0x30] sm:$0xff pattern:$0x73625140]
    %v521 = vld.sshfl [vmem:[#allocation1 + $0x38] sm:$0xff pattern:$0x73625140]
    %v530 = vsel %vm75, %v514, 0.0
    %v531 = vsel %vm75, %v515, 0.0
    %v532 = vadd.f32 %v530, %v531
    %v533 = vsel %vm75, %v516, 0.0
    %v534 = vadd.f32 %v532, %v533
    %v535 = vsel %vm75, %v517, 0.0
    %v536 = vadd.f32 %v534, %v535
    %v537 = vsel %vm75, %v518, 0.0
    %v538 = vadd.f32 %v536, %v537
    %v539 = vsel %vm75, %v519, 0.0
    %v540 = vadd.f32 %v538, %v539
    %v541 = vsel %vm75, %v520, 0.0
    %v542 = vadd.f32 %v540, %v541
    %v543 = vsel %vm75, %v521, 0.0
    %v544 = vadd.f32 %v542, %v543
    %545 = vadd.xlane.f32.xlu0 %v544
    %v546 = vpop.xlane.xlu0 %545
    %vm547 = vcmp.eq.s32.totalorder %v370, 0
    %v548 = vsel %vm547, %v458, 0.0
    %v549 = vadd.f32 %v548, 0.0
    %v550 = vsel %vm547, %v546, 0.0
    %v551 = vadd.f32 %v550, 0.0
    %v552 = vperm.slane %v171, 1
    %v553 = vperm.slane %v171, 3
    %v554 = vperm.slane %v171, 5
    %v555 = vperm.slane %v171, 7
    %v556 = vperm.slane %v172, 1
    %v557 = vperm.slane %v172, 3
    %v558 = vperm.slane %v172, 5
    %v559 = vperm.slane %v172, 7
    %v568 = vperm.slane %v552, 1
    %v569 = vperm.slane %v553, 1
    %v570 = vperm.slane %v554, 1
    %v571 = vperm.slane %v555, 1
    %v572 = vperm.slane %v556, 1
    %v573 = vperm.slane %v557, 1
    %v574 = vperm.slane %v558, 1
    %v575 = vperm.slane %v559, 1
    %v584 = vrot.slane %v569, 6
    %v585 = vrot.slane %v570, 4
    %v586 = vrot.slane %v571, 2
    %v587 = vrot.slane %v573, 6
    %v588 = vrot.slane %v574, 4
    %v589 = vrot.slane %v575, 2
    %v590 = vsel %vm75, %v568, %v584
    %v591 = vsel %vm162, %v585, %v586
    %v592 = vsel %vm164, %v590, %v591
    %v593 = vsel %vm75, %v572, %v587
    %v594 = vsel %vm162, %v588, %v589
    %v595 = vsel %vm164, %v593, %v594
    %v598 = vmul.f32 %v171, %v592
    %v599 = vmul.f32 %v172, %v595
    %602 = vst [vmem:[#allocation1] ss:$4 sm:$0xff] %v598
    %s603 = scalar_lea.vmem [#allocation1], 32
    %604 = vst [vmem:[%s603] ss:$4 sm:$0xff] %v599
    %v605 = vld.sshfl [vmem:[#allocation1] sm:$0xff pattern:$0x73625140]
    %v606 = vld.sshfl [vmem:[#allocation1 + $0x8] sm:$0xff pattern:$0x73625140]
    %v607 = vld.sshfl [vmem:[#allocation1 + $0x10] sm:$0xff pattern:$0x73625140]
    %v608 = vld.sshfl [vmem:[#allocation1 + $0x18] sm:$0xff pattern:$0x73625140]
    %v609 = vld.sshfl [vmem:[#allocation1 + $0x20] sm:$0xff pattern:$0x73625140]
    %v610 = vld.sshfl [vmem:[#allocation1 + $0x28] sm:$0xff pattern:$0x73625140]
    %v611 = vld.sshfl [vmem:[#allocation1 + $0x30] sm:$0xff pattern:$0x73625140]
    %v612 = vld.sshfl [vmem:[#allocation1 + $0x38] sm:$0xff pattern:$0x73625140]
    %v621 = vsel %vm75, %v605, 0.0
    %v622 = vsel %vm75, %v606, 0.0
    %v623 = vadd.f32 %v621, %v622
    %v624 = vsel %vm75, %v607, 0.0
    %v625 = vadd.f32 %v623, %v624
    %v626 = vsel %vm75, %v608, 0.0
    %v627 = vadd.f32 %v625, %v626
    %v628 = vsel %vm75, %v609, 0.0
    %v629 = vadd.f32 %v627, %v628
    %v630 = vsel %vm75, %v610, 0.0
    %v631 = vadd.f32 %v629, %v630
    %v632 = vsel %vm75, %v611, 0.0
    %v633 = vadd.f32 %v631, %v632
    %v634 = vsel %vm75, %v612, 0.0
    %v635 = vadd.f32 %v633, %v634
    %636 = vadd.xlane.f32.xlu0 %v635
    %v637 = vpop.xlane.xlu0 %636
    %v638 = vperm.slane %v280, 1
    %v639 = vperm.slane %v280, 3
    %v640 = vperm.slane %v280, 5
    %v641 = vperm.slane %v280, 7
    %v642 = vperm.slane %v281, 1
    %v643 = vperm.slane %v281, 3
    %v644 = vperm.slane %v281, 5
    %v645 = vperm.slane %v281, 7
    %v654 = vperm.slane %v638, 1
    %v655 = vperm.slane %v639, 1
    %v656 = vperm.slane %v640, 1
    %v657 = vperm.slane %v641, 1
    %v658 = vperm.slane %v642, 1
    %v659 = vperm.slane %v643, 1
    %v660 = vperm.slane %v644, 1
    %v661 = vperm.slane %v645, 1
    %v670 = vrot.slane %v655, 6
    %v671 = vrot.slane %v656, 4
    %v672 = vrot.slane %v657, 2
    %v673 = vrot.slane %v659, 6
    %v674 = vrot.slane %v660, 4
    %v675 = vrot.slane %v661, 2
    %v676 = vsel %vm75, %v654, %v670
    %v677 = vsel %vm162, %v671, %v672
    %v678 = vsel %vm164, %v676, %v677
    %v679 = vsel %vm75, %v658, %v673
    %v680 = vsel %vm162, %v674, %v675
    %v681 = vsel %vm164, %v679, %v680
    %v684 = vmul.f32 %v280, %v678
    %v685 = vmul.f32 %v281, %v681
    %688 = vst [vmem:[#allocation1] ss:$4 sm:$0xff] %v684
    %s689 = scalar_lea.vmem [#allocation1], 32
    %690 = vst [vmem:[%s689] ss:$4 sm:$0xff] %v685
    %v691 = vld.sshfl [vmem:[#allocation1] sm:$0xff pattern:$0x73625140]
    %v692 = vld.sshfl [vmem:[#allocation1 + $0x8] sm:$0xff pattern:$0x73625140]
    %v693 = vld.sshfl [vmem:[#allocation1 + $0x10] sm:$0xff pattern:$0x73625140]
    %v694 = vld.sshfl [vmem:[#allocation1 + $0x18] sm:$0xff pattern:$0x73625140]
    %v695 = vld.sshfl [vmem:[#allocation1 + $0x20] sm:$0xff pattern:$0x73625140]
    %v696 = vld.sshfl [vmem:[#allocation1 + $0x28] sm:$0xff pattern:$0x73625140]
    %v697 = vld.sshfl [vmem:[#allocation1 + $0x30] sm:$0xff pattern:$0x73625140]
    %v698 = vld.sshfl [vmem:[#allocation1 + $0x38] sm:$0xff pattern:$0x73625140]
    %v707 = vsel %vm75, %v691, 0.0
    %v708 = vsel %vm75, %v692, 0.0
    %v709 = vadd.f32 %v707, %v708
    %v710 = vsel %vm75, %v693, 0.0
    %v711 = vadd.f32 %v709, %v710
    %v712 = vsel %vm75, %v694, 0.0
    %v713 = vadd.f32 %v711, %v712
    %v714 = vsel %vm75, %v695, 0.0
    %v715 = vadd.f32 %v713, %v714
    %v716 = vsel %vm75, %v696, 0.0
    %v717 = vadd.f32 %v715, %v716
    %v718 = vsel %vm75, %v697, 0.0
    %v719 = vadd.f32 %v717, %v718
    %v720 = vsel %vm75, %v698, 0.0
    %v721 = vadd.f32 %v719, %v720
    %722 = vadd.xlane.f32.xlu0 %v721
    %v723 = vpop.xlane.xlu0 %722
    %vm724 = vcmp.eq.s32.totalorder %v370, 1
    %v725 = vsel %vm724, %v637, 0.0
    %v726 = vadd.f32 %v549, %v725
    %v727 = vsel %vm724, %v723, 0.0
    %v728 = vadd.f32 %v551, %v727
    %v729 = vld [vmem:[#allocation2] sm:$0x3]
    %v730 = vadd.f32 %v729, %v726
    %vm731 = vcmask 9216
    %732 = vst.msk [vmem:[#allocation2] sm:$0x3] %vm731, %v730
    %v733 = vld [vmem:[#allocation3] sm:$0x3]
    %v734 = vadd.f32 %v733, %v728
    %735 = vst.msk [vmem:[#allocation3] sm:$0x3] %vm731, %v734
    // Predicated region
    $region22: #{tpu_custom_call.1} parent=1 // pred_check
      %p736 = pneg %p40
    $region23: #{tpu_custom_call.1} parent=1 // pred_check_branch
      %738 = sbr.rel (%p736) target = $region25
    $region24: #{tpu_custom_call.1} parent=1 // pred_region
      %v739 = vld [vmem:[#allocation4] sm:$0x3]
      %v740 = vrsqrt.pop %v739
      %v741 = vmul.f32 %v740, %v739
      %v742 = vmul.f32 %v741, %v740
      %v743 = vmul.f32 0.5, %v742
      %v744 = vsub.f32 1.5, %v743
      %v745 = vmul.f32 %v740, %v744
      %v746 = vmul.f32 %v739, %v745
      %vm747 = vcmp.eq.f32.partialorder %v739, inf
      %v748 = vsel %vm747, %v739, %v746
      %vm749 = vcmp.eq.f32.partialorder %v739, 0.0
      %v750 = vand.u32 %v739, 2147483648
      %v751 = vsel %vm749, %v750, %v748
      %v752 = vadd.f32 %v751, 1e-06
      %v753 = vrcp.pop %v752
      %v754 = vmul.f32 %v752, %v753
      %v755 = vsub.f32 1.0, %v754
      %v756 = vmul.f32 %v753, %v755
      %v757 = vadd.f32 %v753, %v756
      %vm758 = vweird.f32 %v752
      %vm759 = vweird.f32 %v753
      %vm760 = vmor %vm758, %vm759
      %v761 = vsel %vm760, %v753, %v757
      %v762 = vand.u32 2147483647, %v752
      %vm763 = vcmp.eq.f32.partialorder %v762, 8.507059e+37
      %v764 = vand.u32 %v752, 2147483648
      %v765 = vor.u32 1.1754944e-38, %v764
      %v766 = vsel %vm763, %v765, %v761
      %v767 = vmul.f32 1.0, %v766
      %v768 = vld [vmem:[#allocation5] sm:$0x3]
      %v769 = vrsqrt.pop %v768
      %v770 = vmul.f32 %v769, %v768
      %v771 = vmul.f32 %v770, %v769
      %v772 = vmul.f32 0.5, %v771
      %v773 = vsub.f32 1.5, %v772
      %v774 = vmul.f32 %v769, %v773
      %v775 = vmul.f32 %v768, %v774
      %vm776 = vcmp.eq.f32.partialorder %v768, inf
      %v777 = vsel %vm776, %v768, %v775
      %vm778 = vcmp.eq.f32.partialorder %v768, 0.0
      %v779 = vand.u32 %v768, 2147483648
      %v780 = vsel %vm778, %v779, %v777
      %v781 = vadd.f32 %v780, 1e-06
      %v782 = vrcp.pop %v781
      %v783 = vmul.f32 %v781, %v782
      %v784 = vsub.f32 1.0, %v783
      %v785 = vmul.f32 %v782, %v784
      %v786 = vadd.f32 %v782, %v785
      %vm787 = vweird.f32 %v781
      %vm788 = vweird.f32 %v782
      %vm789 = vmor %vm787, %vm788
      %v790 = vsel %vm789, %v782, %v786
      %v791 = vand.u32 2147483647, %v781
      %vm792 = vcmp.eq.f32.partialorder %v791, 8.507059e+37
      %v793 = vand.u32 %v781, 2147483648
      %v794 = vor.u32 1.1754944e-38, %v793
      %v795 = vsel %vm792, %v794, %v790
      %v796 = vmul.f32 1.0, %v795
      %v797 = vmul.f32 %v767, %v796
      %v798 = vlaneseq
      %v799 = vshrl.u32 %v798, 7
      %vm800 = vcmp.eq.s32.totalorder %v799, %v370
      %802 = vset.pattern.permute.xlu0 0
      %803 = vperm.xlu0 %802, %v797
      %v804 = vpop.permute.xlu0 %803
      %v806 = vsel %vm800, %v804, 0.0
      %v807 = vsel %vm731, %v806, 0.0
      %v808 = vrot.slane %v807, 4
      %v809 = vadd.f32 %v807, %v808
      %v810 = vrot.slane %v809, 2
      %v811 = vadd.f32 %v809, %v810
      %v812 = vrot.slane %v811, 1
      %v813 = vadd.f32 %v811, %v812
      %v814 = vld [vmem:[#allocation2] sm:$0x3]
      %v815 = vld [vmem:[#allocation3] sm:$0x3]
      %v816 = vmul.f32 %v814, %v815
      %v817 = vmul.f32 %v816, %v804
      %v818 = vmul.f32 %v817, %v813
      %v819 = vsel %vm731, %v818, 0.0
      %820 = vadd.xlane.f32.xlu0 %v819
      %v821 = vpop.xlane.xlu0 %820
      %v822 = vrot.slane %v821, 4
      %v823 = vadd.f32 %v821, %v822
      %v824 = vrot.slane %v823, 2
      %v825 = vadd.f32 %v823, %v824
      %v826 = vrot.slane %v825, 1
      %v827 = vadd.f32 %v825, %v826
      %s828 = vtos %v827
      %s829 = smul.f32 %s828, 9.536743e-07
      %s830 = scalar_lea.smem [#allocation11], 0
      %831 = sst [smem:[%s830]] %s829
    $region25: #{tpu_custom_call.1} parent=1 // pred_fallthru
      _
    // Predicated region
    $region26: #{tpu_custom_call.1} parent=1 // pred_check
      _
    $region27: #{tpu_custom_call.1} parent=1 // pred_check_branch
      %833 = sbr.rel (0) target = $region29
    $region28: #{tpu_custom_call.1} parent=1 // pred_region
      %835 = vsyncadd [#allocation8], 0
      %s837 = sshll.u32 %s2, 4
      %s838 = int_to_ptr.hbm [resolvable:$true] %s837
      %840 = dma.smem_to_hbm [#allocation11], 16, %s838, [#allocation8]
    $region29: #{tpu_custom_call.1} parent=1 // pred_fallthru
      _
    // Predicated region
    $region30: #{tpu_custom_call.1} parent=1 // pred_check
      _
    $region31: #{tpu_custom_call.1} parent=1 // pred_check_branch
      %842 = sbr.rel (0) target = $region33
    $region32: #{tpu_custom_call.1} parent=1 // pred_region
      %844 = dma.done [#allocation8], 16
    $region33: #{tpu_custom_call.1} parent=1 // pred_fallthru
      _
    %845 = sfence
    %846 = vsyncpa [#allocation7], 1
    %847 = vsyncpa [#allocation10], 1
    %848 = vsyncpa [#allocation8], 1

</llo_original>
